<compile_context>
chip_gen: v7x
topology: tpu7x:2x2x1
jax: 0.10.0
libtpu: 0.0.40
codegen_flags: <defaults>
</compile_context>

<pallas_src>
import math

import jax
import jax.numpy as jnp
from jax.experimental import pallas as pl
from jax.experimental.pallas import tpu as pltpu


def _features_linear_kernel(x_ref, offsets_ref, w_ref, bias_ref, out_ref):
    """x_ref: (TB, F) int32 VMEM; offsets_ref: (F,) int32 SMEM;
    w_ref: (1, Vp) f32 VMEM (lane-dense weight row); bias_ref: (1,) f32 SMEM;
    out_ref: (1, TB) f32 VMEM (batch along lanes)."""
    x = x_ref[...]                          # (TB, F) int32
    w = w_ref[...]                          # (1, Vp) f32
    TB, F = x.shape
    Vp = w.shape[1]

    # Fused multi-hot over the offset-shifted vocabulary:
    #   mh[b, v] = #{ f : x[b, f] + offsets[f] == v }
    # Fields map to disjoint vocab ranges, so this is 0/1; summing gathered
    # embeddings over fields == dot(mh, W).
    iota = jax.lax.broadcasted_iota(jnp.int32, (TB, Vp), 1)
    mh = jnp.zeros((TB, Vp), jnp.float32)
    for f in range(F):                                     # static unroll, F is small
        idx_f = x[:, f:f + 1] + offsets_ref[f]             # (TB, 1) int32
        mh = mh + (iota == idx_f).astype(jnp.float32)

    # VPU multiply + lane reduce (no MXU), then bias. f32 accumulation throughout.
    row = jnp.sum(mh * w, axis=1) + bias_ref[0]            # (TB,)
    out_ref[...] = row.reshape(1, TB)                      # lane-dense store


def features_linear(x, weight, bias, offsets, *, block_b=128):
    """x: (B, F) integer field indices; weight: (V, 1) f32; bias: (1,) f32;
    offsets: (F,) int32. Returns (B, 1) f32."""
    B, F = x.shape
    V = weight.shape[0]

    # Lane-dense weight row, padded to a multiple of 128 lanes (pad never indexed).
    v_pad = ((V + 127) // 128) * 128
    w_row = jnp.zeros((1, v_pad), jnp.float32)
    w_row = w_row.at[0, :V].set(weight.reshape(-1).astype(jnp.float32))

    # Pad batch to the block size (pad rows use index 0 and are discarded below).
    b_pad = ((B + block_b - 1) // block_b) * block_b
    x_p = jnp.zeros((b_pad, F), jnp.int32).at[:B].set(x.astype(jnp.int32))

    out = pl.pallas_call(
        _features_linear_kernel,
        out_shape=jax.ShapeDtypeStruct((1, b_pad), jnp.float32),
        grid=(b_pad // block_b,),
        in_specs=[
            pl.BlockSpec((block_b, F), lambda i: (i, 0)),              # idx tile (VMEM)
            pl.BlockSpec(memory_space=pltpu.MemorySpace.SMEM),         # offsets
            pl.BlockSpec((1, v_pad), lambda i: (0, 0)),                # weight row (VMEM)
            pl.BlockSpec(memory_space=pltpu.MemorySpace.SMEM),         # bias
        ],
        out_specs=pl.BlockSpec((1, block_b), lambda i: (0, i)),        # lane-dense output
        compiler_params=pltpu.CompilerParams(
            dimension_semantics=("parallel",),
        ),
    )(x_p, offsets.astype(jnp.int32), w_row, bias.astype(jnp.float32))

    return out[0, :B].reshape(B, 1)


if __name__ == "__main__":
    # Module config (small, deterministic).
    field_dims = [10, 20, 30]
    num_fields = len(field_dims)
    vocab = sum(field_dims)
    batch = 8

    key = jax.random.PRNGKey(0)
    k_w, k_x = jax.random.split(key)

    # Parameters: xavier_uniform_ on fc.weight (vocab, 1); bias zeros((1,)).
    fan_in, fan_out = vocab, 1
    limit = math.sqrt(6.0 / (fan_in + fan_out))
    weight = jax.random.uniform(
        k_w, (vocab, 1), dtype=jnp.float32, minval=-limit, maxval=limit
    )
    bias = jnp.zeros((1,), dtype=jnp.float32)

    # offsets = (0, cumsum(field_dims)[:-1])
    off_list = [0]
    for d in field_dims[:-1]:
        off_list.append(off_list[-1] + d)
    offsets = jnp.asarray(off_list, dtype=jnp.int32)

    # Input: per-field categorical indices within each field's cardinality.
    cols = []
    for f, dim in enumerate(field_dims):
        k_x, sub = jax.random.split(k_x)
        cols.append(jax.random.randint(sub, (batch,), 0, dim, dtype=jnp.int32))
    x = jnp.stack(cols, axis=1)  # (batch, num_fields)

    out = features_linear(x, weight, bias, offsets)
    out = jax.block_until_ready(out)

    # Pure-JAX reference (embedding lookup + field-sum + bias).
    idx_ref = x + offsets[None, :]
    ref = jnp.take(weight[:, 0], idx_ref, axis=0).sum(axis=1, keepdims=True) + bias
    assert out.shape == (batch, 1)
    assert jnp.allclose(out, ref, atol=1e-5, rtol=1e-5)

    print("KERNEL_OK")
</pallas_src>

<mosaic_0001>
module attributes {stable_mosaic.version = 11 : i64} {
  func.func @_features_linear_kernel(%arg0: i32, %arg1: memref<128x3xi32, #tpu.memory_space<vmem>>, %arg2: memref<3xi32, #tpu.memory_space<smem>>, %arg3: memref<1x128xf32, #tpu.memory_space<vmem>>, %arg4: memref<1xf32, #tpu.memory_space<smem>>, %arg5: memref<1x128xf32, #tpu.memory_space<vmem>>) attributes {dimension_semantics = [#tpu.dimension_semantics<parallel>], iteration_bounds = array<i64: 1>, scalar_prefetch = 0 : i64, scratch_operands = 0 : i64, tpu.core_type = #tpu.core_type<tc>, window_params = [{transform_indices = @transform_0, window_bounds = array<i64: 128, 3>}, {transform_indices = @transform_1, window_bounds = array<i64: 3>}, {pipeline_mode = #tpu.pipeline_mode<synchronous>, transform_indices = @transform_2, window_bounds = array<i64: 1, 128>}, {transform_indices = @transform_3, window_bounds = array<i64: 1>}, {transform_indices = @transform_4, window_bounds = array<i64: 1, 128>}]} {
    %c0 = arith.constant 0 : index
    %c0_0 = arith.constant 0 : index
    %0 = vector.load %arg1[%c0, %c0_0] : memref<128x3xi32, #tpu.memory_space<vmem>>, vector<128x3xi32>
    %c0_1 = arith.constant 0 : index
    %c0_2 = arith.constant 0 : index
    %1 = vector.load %arg3[%c0_1, %c0_2] : memref<1x128xf32, #tpu.memory_space<vmem>>, vector<1x128xf32>
    %2 = tpu.iota {dimensions = array<i32: 1>} : vector<128x128xi32>
    %cst = arith.constant 0.000000e+00 : f32
    %3 = vector.broadcast %cst : f32 to vector<128x128xf32>
    %4 = vector.extract_strided_slice %0 {offsets = [0, 0], sizes = [128, 1], strides = [1, 1]} : vector<128x3xi32> to vector<128x1xi32>
    %c0_3 = arith.constant 0 : index
    %5 = memref.load %arg2[%c0_3] : memref<3xi32, #tpu.memory_space<smem>>
    %6 = vector.broadcast %5 : i32 to vector<128x1xi32>
    %7 = arith.addi %4, %6 : vector<128x1xi32>
    %8 = vector.broadcast %7 : vector<128x1xi32> to vector<128x128xi32>
    %9 = arith.cmpi eq, %2, %8 : vector<128x128xi32>
    %10 = arith.extui %9 : vector<128x128xi1> to vector<128x128xi32>
    %11 = arith.sitofp %10 : vector<128x128xi32> to vector<128x128xf32>
    %12 = arith.addf %3, %11 : vector<128x128xf32>
    %13 = vector.extract_strided_slice %0 {offsets = [0, 1], sizes = [128, 1], strides = [1, 1]} : vector<128x3xi32> to vector<128x1xi32>
    %c1 = arith.constant 1 : index
    %14 = memref.load %arg2[%c1] : memref<3xi32, #tpu.memory_space<smem>>
    %15 = vector.broadcast %14 : i32 to vector<128x1xi32>
    %16 = arith.addi %13, %15 : vector<128x1xi32>
    %17 = vector.broadcast %16 : vector<128x1xi32> to vector<128x128xi32>
    %18 = arith.cmpi eq, %2, %17 : vector<128x128xi32>
    %19 = arith.extui %18 : vector<128x128xi1> to vector<128x128xi32>
    %20 = arith.sitofp %19 : vector<128x128xi32> to vector<128x128xf32>
    %21 = arith.addf %12, %20 : vector<128x128xf32>
    %22 = vector.extract_strided_slice %0 {offsets = [0, 2], sizes = [128, 1], strides = [1, 1]} : vector<128x3xi32> to vector<128x1xi32>
    %c2 = arith.constant 2 : index
    %23 = memref.load %arg2[%c2] : memref<3xi32, #tpu.memory_space<smem>>
    %24 = vector.broadcast %23 : i32 to vector<128x1xi32>
    %25 = arith.addi %22, %24 : vector<128x1xi32>
    %26 = vector.broadcast %25 : vector<128x1xi32> to vector<128x128xi32>
    %27 = arith.cmpi eq, %2, %26 : vector<128x128xi32>
    %28 = arith.extui %27 : vector<128x128xi1> to vector<128x128xi32>
    %29 = arith.sitofp %28 : vector<128x128xi32> to vector<128x128xf32>
    %30 = arith.addf %21, %29 : vector<128x128xf32>
    %31 = vector.broadcast %1 : vector<1x128xf32> to vector<128x128xf32>
    %32 = arith.mulf %30, %31 : vector<128x128xf32>
    %cst_4 = arith.constant dense<0.000000e+00> : vector<128xf32>
    %33 = vector.multi_reduction <add>, %32, %cst_4 [1] : vector<128x128xf32> to vector<128xf32>
    %c0_5 = arith.constant 0 : index
    %34 = memref.load %arg4[%c0_5] : memref<1xf32, #tpu.memory_space<smem>>
    %35 = vector.broadcast %34 : f32 to vector<128xf32>
    %36 = arith.addf %33, %35 : vector<128xf32>
    %37 = vector.shape_cast %36 : vector<128xf32> to vector<1x128xf32>
    %c0_6 = arith.constant 0 : index
    %c0_7 = arith.constant 0 : index
    %38 = vector.load %arg5[%c0_6, %c0_7] : memref<1x128xf32, #tpu.memory_space<vmem>>, vector<1x128xf32>
    tpu.vector_store %arg5[%c0_6, %c0_7], %37 {strides = array<i32>} : memref<1x128xf32, #tpu.memory_space<vmem>>, vector<1x128xf32>,
    return
  }
  func.func @transform_0(%arg0: i32) -> (i32, i32) {
    %c0_i32 = arith.constant 0 : i32
    %c0_i32_0 = arith.constant 0 : i32
    return %arg0, %c0_i32 : i32, i32
  }
  func.func @transform_1(%arg0: i32) -> i32 {
    %c0_i32 = arith.constant 0 : i32
    %c0_i32_0 = arith.constant 0 : i32
    return %c0_i32 : i32
  }
  func.func @transform_2(%arg0: i32) -> (i32, i32) {
    %c0_i32 = arith.constant 0 : i32
    %c0_i32_0 = arith.constant 0 : i32
    %c0_i32_1 = arith.constant 0 : i32
    return %c0_i32, %c0_i32_0 : i32, i32
  }
  func.func @transform_3(%arg0: i32) -> i32 {
    %c0_i32 = arith.constant 0 : i32
    %c0_i32_0 = arith.constant 0 : i32
    return %c0_i32 : i32
  }
  func.func @transform_4(%arg0: i32) -> (i32, i32) {
    %c0_i32 = arith.constant 0 : i32
    %c0_i32_0 = arith.constant 0 : i32
    return %c0_i32, %arg0 : i32, i32
  }
}

</mosaic_0001>

<llo_original>
// kernel: tpu_custom_call.1
$region0: #{tpu_custom_call.1}
  #allocation0 [shape = 'u32[]', space=smem, size = 0x4, offset = 0x4, fixed_abs, tag = 'smem constant byte address 0x4 - core index']
  #allocation1 [shape = 'u32[144,128]{1,0:T(1,128)}', space=vmem, size = 0x12000, scoped, tag = 'internal scratch']
  #allocation2 [shape = 'f32[1]{0:T(128)S(6)}', space=smem, size = 0x200, scoped, tag = 'scoped memory for tpu_custom_call.1']
  %s0 = inlined_call_operand.vmem [shape: s32[128,3], index: 0, kind: input, shape index: {}]
  %s1 = inlined_call_operand.vmem [shape: s32[3], index: 1, kind: input, shape index: {}]
  %s2 = inlined_call_operand.vmem [shape: f32[1,128], index: 2, kind: input, shape index: {}]
  %s3 = inlined_call_operand.<no memory space> [shape: f32[1], index: 3, kind: input, shape index: {}]
  %s4 = inlined_call_operand.hbm [shape: f32[1,128], index: 4, kind: output, shape index: {}]
  %s5 = sld [smem:[#allocation0]]
  $region30: #{tpu_custom_call.1} parent=0
    _
  %s7 = ssub.s32 1, %s5
  %s8 = scalar_select 0, %s7, %s5
  %9 = sst [smem:[#allocation2]] %s3
  $region1: #{tpu_custom_call.1} parent=0
    #allocation3 [shape = 'u8[512]{0}', space=smem, size = 0x200, scoped, tag = 'input window, operand 1, single buffered']
    #allocation4 [shape = 's32[1]{0}', space=sflag, size = 0x4, scoped, tag = 'scoped memory for tpu_custom_call.1']
    #allocation5 [shape = 's32[1]{0}', space=sflag, size = 0x4, scoped, tag = 'scoped memory for tpu_custom_call.1']
    #allocation6 [shape = 'u8[512]{0}', space=vmem, size = 0x400, scoped, tag = 'output window, operand 0, single buffered']
    %10 = vsyncpa [#allocation5], 0
    %11 = vsyncpa [#allocation4], 0
    // Predicated region
    $region2: #{tpu_custom_call.1} parent=1 // pred_check
      _
    $region3: #{tpu_custom_call.1} parent=1 // pred_check_branch
      %13 = sbr.rel (0) target = $region5
    $region4: #{tpu_custom_call.1} parent=1 // pred_region
      _
    $region5: #{tpu_custom_call.1} parent=1 // pred_fallthru
      _
    // Predicated region
    $region6: #{tpu_custom_call.1} parent=1 // pred_check
      _
    $region7: #{tpu_custom_call.1} parent=1 // pred_check_branch
      %15 = sbr.rel (0) target = $region9
    $region8: #{tpu_custom_call.1} parent=1 // pred_region
      %s17 = ssub.s32 16, 16
      %18 = vsyncadd [#allocation5], %s17
      %s20 = sshll.u32 %s1, 4
      %s21 = int_to_ptr.vmem [resolvable:$true] %s20
      %23 = dma.vmem_to_smem %s21, 16, [#allocation3], [#allocation5]
    $region9: #{tpu_custom_call.1} parent=1 // pred_fallthru
      _
    // Predicated region
    $region10: #{tpu_custom_call.1} parent=1 // pred_check
      _
    $region11: #{tpu_custom_call.1} parent=1 // pred_check_branch
      %25 = sbr.rel (0) target = $region13
    $region12: #{tpu_custom_call.1} parent=1 // pred_region
      _
    $region13: #{tpu_custom_call.1} parent=1 // pred_fallthru
      _
    // Predicated region
    $region14: #{tpu_custom_call.1} parent=1 // pred_check
      _
    $region15: #{tpu_custom_call.1} parent=1 // pred_check_branch
      %27 = sbr.rel (0) target = $region17
    $region16: #{tpu_custom_call.1} parent=1 // pred_region
      _
    $region17: #{tpu_custom_call.1} parent=1 // pred_fallthru
      _
    // Predicated region
    $region18: #{tpu_custom_call.1} parent=1 // pred_check
      _
    $region19: #{tpu_custom_call.1} parent=1 // pred_check_branch
      %29 = sbr.rel (0) target = $region21
    $region20: #{tpu_custom_call.1} parent=1 // pred_region
      %30 = dma.done [#allocation5], 16
    $region21: #{tpu_custom_call.1} parent=1 // pred_fallthru
      _
    %31 = sfence
    %v32 = vld [vmem:[%s0] sm:$0xff]
    %v33 = vld [vmem:[%s0 + $0x8] sm:$0xff]
    %v34 = vld [vmem:[%s0 + $0x10] sm:$0xff]
    %v35 = vld [vmem:[%s0 + $0x18] sm:$0xff]
    %v36 = vld [vmem:[%s0 + $0x20] sm:$0xff]
    %v37 = vld [vmem:[%s0 + $0x28] sm:$0xff]
    %v38 = vld [vmem:[%s0 + $0x30] sm:$0xff]
    %v39 = vld [vmem:[%s0 + $0x38] sm:$0xff]
    %v40 = vld [vmem:[%s0 + $0x40] sm:$0xff]
    %v41 = vld [vmem:[%s0 + $0x48] sm:$0xff]
    %v42 = vld [vmem:[%s0 + $0x50] sm:$0xff]
    %v43 = vld [vmem:[%s0 + $0x58] sm:$0xff]
    %v44 = vld [vmem:[%s0 + $0x60] sm:$0xff]
    %v45 = vld [vmem:[%s0 + $0x68] sm:$0xff]
    %v46 = vld [vmem:[%s0 + $0x70] sm:$0xff]
    %v47 = vld [vmem:[%s0 + $0x78] sm:$0xff]
    %v48 = vld [vmem:[%s2] sm:$0x1]
    %v49 = vlaneseq
    %v50 = vand.u32 %v49, 127
    %s51 = sld [smem:[#allocation3]]
    %v52 = vstv %s51
    %v53 = vadd.s32 %v32, %v52
    %v54 = vadd.s32 %v33, %v52
    %v55 = vadd.s32 %v34, %v52
    %v56 = vadd.s32 %v35, %v52
    %v57 = vadd.s32 %v36, %v52
    %v58 = vadd.s32 %v37, %v52
    %v59 = vadd.s32 %v38, %v52
    %v60 = vadd.s32 %v39, %v52
    %v61 = vadd.s32 %v40, %v52
    %v62 = vadd.s32 %v41, %v52
    %v63 = vadd.s32 %v42, %v52
    %v64 = vadd.s32 %v43, %v52
    %v65 = vadd.s32 %v44, %v52
    %v66 = vadd.s32 %v45, %v52
    %v67 = vadd.s32 %v46, %v52
    %v68 = vadd.s32 %v47, %v52
    %69 = vset.pattern.permute.xlu0 0
    %70 = vperm.xlu0 %69, %v53
    %v71 = vpop.permute.xlu0 %70
    %72 = vset.pattern.permute.xlu0 0
    %73 = vperm.xlu0 %72, %v54
    %v74 = vpop.permute.xlu0 %73
    %75 = vset.pattern.permute.xlu0 0
    %76 = vperm.xlu0 %75, %v55
    %v77 = vpop.permute.xlu0 %76
    %78 = vset.pattern.permute.xlu0 0
    %79 = vperm.xlu0 %78, %v56
    %v80 = vpop.permute.xlu0 %79
    %81 = vset.pattern.permute.xlu0 0
    %82 = vperm.xlu0 %81, %v57
    %v83 = vpop.permute.xlu0 %82
    %84 = vset.pattern.permute.xlu0 0
    %85 = vperm.xlu0 %84, %v58
    %v86 = vpop.permute.xlu0 %85
    %87 = vset.pattern.permute.xlu0 0
    %88 = vperm.xlu0 %87, %v59
    %v89 = vpop.permute.xlu0 %88
    %90 = vset.pattern.permute.xlu0 0
    %91 = vperm.xlu0 %90, %v60
    %v92 = vpop.permute.xlu0 %91
    %93 = vset.pattern.permute.xlu0 0
    %94 = vperm.xlu0 %93, %v61
    %v95 = vpop.permute.xlu0 %94
    %96 = vset.pattern.permute.xlu0 0
    %97 = vperm.xlu0 %96, %v62
    %v98 = vpop.permute.xlu0 %97
    %99 = vset.pattern.permute.xlu0 0
    %100 = vperm.xlu0 %99, %v63
    %v101 = vpop.permute.xlu0 %100
    %102 = vset.pattern.permute.xlu0 0
    %103 = vperm.xlu0 %102, %v64
    %v104 = vpop.permute.xlu0 %103
    %105 = vset.pattern.permute.xlu0 0
    %106 = vperm.xlu0 %105, %v65
    %v107 = vpop.permute.xlu0 %106
    %108 = vset.pattern.permute.xlu0 0
    %109 = vperm.xlu0 %108, %v66
    %v110 = vpop.permute.xlu0 %109
    %111 = vset.pattern.permute.xlu0 0
    %112 = vperm.xlu0 %111, %v67
    %v113 = vpop.permute.xlu0 %112
    %114 = vset.pattern.permute.xlu0 0
    %115 = vperm.xlu0 %114, %v68
    %v116 = vpop.permute.xlu0 %115
    %vm117 = vcmp.eq.s32.totalorder %v50, %v71
    %vm118 = vcmp.eq.s32.totalorder %v50, %v74
    %vm119 = vcmp.eq.s32.totalorder %v50, %v77
    %vm120 = vcmp.eq.s32.totalorder %v50, %v80
    %vm121 = vcmp.eq.s32.totalorder %v50, %v83
    %vm122 = vcmp.eq.s32.totalorder %v50, %v86
    %vm123 = vcmp.eq.s32.totalorder %v50, %v89
    %vm124 = vcmp.eq.s32.totalorder %v50, %v92
    %vm125 = vcmp.eq.s32.totalorder %v50, %v95
    %vm126 = vcmp.eq.s32.totalorder %v50, %v98
    %vm127 = vcmp.eq.s32.totalorder %v50, %v101
    %vm128 = vcmp.eq.s32.totalorder %v50, %v104
    %vm129 = vcmp.eq.s32.totalorder %v50, %v107
    %vm130 = vcmp.eq.s32.totalorder %v50, %v110
    %vm131 = vcmp.eq.s32.totalorder %v50, %v113
    %vm132 = vcmp.eq.s32.totalorder %v50, %v116
    %v133 = vsel %vm117, 1, 0
    %v134 = vsel %vm118, 1, 0
    %v135 = vsel %vm119, 1, 0
    %v136 = vsel %vm120, 1, 0
    %v137 = vsel %vm121, 1, 0
    %v138 = vsel %vm122, 1, 0
    %v139 = vsel %vm123, 1, 0
    %v140 = vsel %vm124, 1, 0
    %v141 = vsel %vm125, 1, 0
    %v142 = vsel %vm126, 1, 0
    %v143 = vsel %vm127, 1, 0
    %v144 = vsel %vm128, 1, 0
    %v145 = vsel %vm129, 1, 0
    %v146 = vsel %vm130, 1, 0
    %v147 = vsel %vm131, 1, 0
    %v148 = vsel %vm132, 1, 0
    %v149 = vcvt.s32.f32 %v133
    %v150 = vcvt.s32.f32 %v134
    %v151 = vcvt.s32.f32 %v135
    %v152 = vcvt.s32.f32 %v136
    %v153 = vcvt.s32.f32 %v137
    %v154 = vcvt.s32.f32 %v138
    %v155 = vcvt.s32.f32 %v139
    %v156 = vcvt.s32.f32 %v140
    %v157 = vcvt.s32.f32 %v141
    %v158 = vcvt.s32.f32 %v142
    %v159 = vcvt.s32.f32 %v143
    %v160 = vcvt.s32.f32 %v144
    %v161 = vcvt.s32.f32 %v145
    %v162 = vcvt.s32.f32 %v146
    %v163 = vcvt.s32.f32 %v147
    %v164 = vcvt.s32.f32 %v148
    %v165 = vadd.f32 %v149, 0.0
    %v166 = vadd.f32 %v150, 0.0
    %v167 = vadd.f32 %v151, 0.0
    %v168 = vadd.f32 %v152, 0.0
    %v169 = vadd.f32 %v153, 0.0
    %v170 = vadd.f32 %v154, 0.0
    %v171 = vadd.f32 %v155, 0.0
    %v172 = vadd.f32 %v156, 0.0
    %v173 = vadd.f32 %v157, 0.0
    %v174 = vadd.f32 %v158, 0.0
    %v175 = vadd.f32 %v159, 0.0
    %v176 = vadd.f32 %v160, 0.0
    %v177 = vadd.f32 %v161, 0.0
    %v178 = vadd.f32 %v162, 0.0
    %v179 = vadd.f32 %v163, 0.0
    %v180 = vadd.f32 %v164, 0.0
    %s181 = sld [smem:[#allocation3 + $0x1]]
    %v182 = vstv %s181
    %v183 = vadd.s32 %v32, %v182
    %v184 = vadd.s32 %v33, %v182
    %v185 = vadd.s32 %v34, %v182
    %v186 = vadd.s32 %v35, %v182
    %v187 = vadd.s32 %v36, %v182
    %v188 = vadd.s32 %v37, %v182
    %v189 = vadd.s32 %v38, %v182
    %v190 = vadd.s32 %v39, %v182
    %v191 = vadd.s32 %v40, %v182
    %v192 = vadd.s32 %v41, %v182
    %v193 = vadd.s32 %v42, %v182
    %v194 = vadd.s32 %v43, %v182
    %v195 = vadd.s32 %v44, %v182
    %v196 = vadd.s32 %v45, %v182
    %v197 = vadd.s32 %v46, %v182
    %v198 = vadd.s32 %v47, %v182
    %199 = vset.pattern.permute.xlu0 1
    %200 = vperm.xlu0 %199, %v183
    %v201 = vpop.permute.xlu0 %200
    %202 = vset.pattern.permute.xlu0 1
    %203 = vperm.xlu0 %202, %v184
    %v204 = vpop.permute.xlu0 %203
    %205 = vset.pattern.permute.xlu0 1
    %206 = vperm.xlu0 %205, %v185
    %v207 = vpop.permute.xlu0 %206
    %208 = vset.pattern.permute.xlu0 1
    %209 = vperm.xlu0 %208, %v186
    %v210 = vpop.permute.xlu0 %209
    %211 = vset.pattern.permute.xlu0 1
    %212 = vperm.xlu0 %211, %v187
    %v213 = vpop.permute.xlu0 %212
    %214 = vset.pattern.permute.xlu0 1
    %215 = vperm.xlu0 %214, %v188
    %v216 = vpop.permute.xlu0 %215
    %217 = vset.pattern.permute.xlu0 1
    %218 = vperm.xlu0 %217, %v189
    %v219 = vpop.permute.xlu0 %218
    %220 = vset.pattern.permute.xlu0 1
    %221 = vperm.xlu0 %220, %v190
    %v222 = vpop.permute.xlu0 %221
    %223 = vset.pattern.permute.xlu0 1
    %224 = vperm.xlu0 %223, %v191
    %v225 = vpop.permute.xlu0 %224
    %226 = vset.pattern.permute.xlu0 1
    %227 = vperm.xlu0 %226, %v192
    %v228 = vpop.permute.xlu0 %227
    %229 = vset.pattern.permute.xlu0 1
    %230 = vperm.xlu0 %229, %v193
    %v231 = vpop.permute.xlu0 %230
    %232 = vset.pattern.permute.xlu0 1
    %233 = vperm.xlu0 %232, %v194
    %v234 = vpop.permute.xlu0 %233
    %235 = vset.pattern.permute.xlu0 1
    %236 = vperm.xlu0 %235, %v195
    %v237 = vpop.permute.xlu0 %236
    %238 = vset.pattern.permute.xlu0 1
    %239 = vperm.xlu0 %238, %v196
    %v240 = vpop.permute.xlu0 %239
    %241 = vset.pattern.permute.xlu0 1
    %242 = vperm.xlu0 %241, %v197
    %v243 = vpop.permute.xlu0 %242
    %244 = vset.pattern.permute.xlu0 1
    %245 = vperm.xlu0 %244, %v198
    %v246 = vpop.permute.xlu0 %245
    %vm247 = vcmp.eq.s32.totalorder %v50, %v201
    %vm248 = vcmp.eq.s32.totalorder %v50, %v204
    %vm249 = vcmp.eq.s32.totalorder %v50, %v207
    %vm250 = vcmp.eq.s32.totalorder %v50, %v210
    %vm251 = vcmp.eq.s32.totalorder %v50, %v213
    %vm252 = vcmp.eq.s32.totalorder %v50, %v216
    %vm253 = vcmp.eq.s32.totalorder %v50, %v219
    %vm254 = vcmp.eq.s32.totalorder %v50, %v222
    %vm255 = vcmp.eq.s32.totalorder %v50, %v225
    %vm256 = vcmp.eq.s32.totalorder %v50, %v228
    %vm257 = vcmp.eq.s32.totalorder %v50, %v231
    %vm258 = vcmp.eq.s32.totalorder %v50, %v234
    %vm259 = vcmp.eq.s32.totalorder %v50, %v237
    %vm260 = vcmp.eq.s32.totalorder %v50, %v240
    %vm261 = vcmp.eq.s32.totalorder %v50, %v243
    %vm262 = vcmp.eq.s32.totalorder %v50, %v246
    %v263 = vsel %vm247, 1, 0
    %v264 = vsel %vm248, 1, 0
    %v265 = vsel %vm249, 1, 0
    %v266 = vsel %vm250, 1, 0
    %v267 = vsel %vm251, 1, 0
    %v268 = vsel %vm252, 1, 0
    %v269 = vsel %vm253, 1, 0
    %v270 = vsel %vm254, 1, 0
    %v271 = vsel %vm255, 1, 0
    %v272 = vsel %vm256, 1, 0
    %v273 = vsel %vm257, 1, 0
    %v274 = vsel %vm258, 1, 0
    %v275 = vsel %vm259, 1, 0
    %v276 = vsel %vm260, 1, 0
    %v277 = vsel %vm261, 1, 0
    %v278 = vsel %vm262, 1, 0
    %v279 = vcvt.s32.f32 %v263
    %v280 = vcvt.s32.f32 %v264
    %v281 = vcvt.s32.f32 %v265
    %v282 = vcvt.s32.f32 %v266
    %v283 = vcvt.s32.f32 %v267
    %v284 = vcvt.s32.f32 %v268
    %v285 = vcvt.s32.f32 %v269
    %v286 = vcvt.s32.f32 %v270
    %v287 = vcvt.s32.f32 %v271
    %v288 = vcvt.s32.f32 %v272
    %v289 = vcvt.s32.f32 %v273
    %v290 = vcvt.s32.f32 %v274
    %v291 = vcvt.s32.f32 %v275
    %v292 = vcvt.s32.f32 %v276
    %v293 = vcvt.s32.f32 %v277
    %v294 = vcvt.s32.f32 %v278
    %v295 = vadd.f32 %v165, %v279
    %v296 = vadd.f32 %v166, %v280
    %v297 = vadd.f32 %v167, %v281
    %v298 = vadd.f32 %v168, %v282
    %v299 = vadd.f32 %v169, %v283
    %v300 = vadd.f32 %v170, %v284
    %v301 = vadd.f32 %v171, %v285
    %v302 = vadd.f32 %v172, %v286
    %v303 = vadd.f32 %v173, %v287
    %v304 = vadd.f32 %v174, %v288
    %v305 = vadd.f32 %v175, %v289
    %v306 = vadd.f32 %v176, %v290
    %v307 = vadd.f32 %v177, %v291
    %v308 = vadd.f32 %v178, %v292
    %v309 = vadd.f32 %v179, %v293
    %v310 = vadd.f32 %v180, %v294
    %s311 = sld [smem:[#allocation3 + $0x2]]
    %v312 = vstv %s311
    %v313 = vadd.s32 %v32, %v312
    %v314 = vadd.s32 %v33, %v312
    %v315 = vadd.s32 %v34, %v312
    %v316 = vadd.s32 %v35, %v312
    %v317 = vadd.s32 %v36, %v312
    %v318 = vadd.s32 %v37, %v312
    %v319 = vadd.s32 %v38, %v312
    %v320 = vadd.s32 %v39, %v312
    %v321 = vadd.s32 %v40, %v312
    %v322 = vadd.s32 %v41, %v312
    %v323 = vadd.s32 %v42, %v312
    %v324 = vadd.s32 %v43, %v312
    %v325 = vadd.s32 %v44, %v312
    %v326 = vadd.s32 %v45, %v312
    %v327 = vadd.s32 %v46, %v312
    %v328 = vadd.s32 %v47, %v312
    %329 = vset.pattern.permute.xlu0 2
    %330 = vperm.xlu0 %329, %v313
    %v331 = vpop.permute.xlu0 %330
    %332 = vset.pattern.permute.xlu0 2
    %333 = vperm.xlu0 %332, %v314
    %v334 = vpop.permute.xlu0 %333
    %335 = vset.pattern.permute.xlu0 2
    %336 = vperm.xlu0 %335, %v315
    %v337 = vpop.permute.xlu0 %336
    %338 = vset.pattern.permute.xlu0 2
    %339 = vperm.xlu0 %338, %v316
    %v340 = vpop.permute.xlu0 %339
    %341 = vset.pattern.permute.xlu0 2
    %342 = vperm.xlu0 %341, %v317
    %v343 = vpop.permute.xlu0 %342
    %344 = vset.pattern.permute.xlu0 2
    %345 = vperm.xlu0 %344, %v318
    %v346 = vpop.permute.xlu0 %345
    %347 = vset.pattern.permute.xlu0 2
    %348 = vperm.xlu0 %347, %v319
    %v349 = vpop.permute.xlu0 %348
    %350 = vset.pattern.permute.xlu0 2
    %351 = vperm.xlu0 %350, %v320
    %v352 = vpop.permute.xlu0 %351
    %353 = vset.pattern.permute.xlu0 2
    %354 = vperm.xlu0 %353, %v321
    %v355 = vpop.permute.xlu0 %354
    %356 = vset.pattern.permute.xlu0 2
    %357 = vperm.xlu0 %356, %v322
    %v358 = vpop.permute.xlu0 %357
    %359 = vset.pattern.permute.xlu0 2
    %360 = vperm.xlu0 %359, %v323
    %v361 = vpop.permute.xlu0 %360
    %362 = vset.pattern.permute.xlu0 2
    %363 = vperm.xlu0 %362, %v324
    %v364 = vpop.permute.xlu0 %363
    %365 = vset.pattern.permute.xlu0 2
    %366 = vperm.xlu0 %365, %v325
    %v367 = vpop.permute.xlu0 %366
    %368 = vset.pattern.permute.xlu0 2
    %369 = vperm.xlu0 %368, %v326
    %v370 = vpop.permute.xlu0 %369
    %371 = vset.pattern.permute.xlu0 2
    %372 = vperm.xlu0 %371, %v327
    %v373 = vpop.permute.xlu0 %372
    %374 = vset.pattern.permute.xlu0 2
    %375 = vperm.xlu0 %374, %v328
    %v376 = vpop.permute.xlu0 %375
    %vm377 = vcmp.eq.s32.totalorder %v50, %v331
    %vm378 = vcmp.eq.s32.totalorder %v50, %v334
    %vm379 = vcmp.eq.s32.totalorder %v50, %v337
    %vm380 = vcmp.eq.s32.totalorder %v50, %v340
    %vm381 = vcmp.eq.s32.totalorder %v50, %v343
    %vm382 = vcmp.eq.s32.totalorder %v50, %v346
    %vm383 = vcmp.eq.s32.totalorder %v50, %v349
    %vm384 = vcmp.eq.s32.totalorder %v50, %v352
    %vm385 = vcmp.eq.s32.totalorder %v50, %v355
    %vm386 = vcmp.eq.s32.totalorder %v50, %v358
    %vm387 = vcmp.eq.s32.totalorder %v50, %v361
    %vm388 = vcmp.eq.s32.totalorder %v50, %v364
    %vm389 = vcmp.eq.s32.totalorder %v50, %v367
    %vm390 = vcmp.eq.s32.totalorder %v50, %v370
    %vm391 = vcmp.eq.s32.totalorder %v50, %v373
    %vm392 = vcmp.eq.s32.totalorder %v50, %v376
    %v393 = vsel %vm377, 1, 0
    %v394 = vsel %vm378, 1, 0
    %v395 = vsel %vm379, 1, 0
    %v396 = vsel %vm380, 1, 0
    %v397 = vsel %vm381, 1, 0
    %v398 = vsel %vm382, 1, 0
    %v399 = vsel %vm383, 1, 0
    %v400 = vsel %vm384, 1, 0
    %v401 = vsel %vm385, 1, 0
    %v402 = vsel %vm386, 1, 0
    %v403 = vsel %vm387, 1, 0
    %v404 = vsel %vm388, 1, 0
    %v405 = vsel %vm389, 1, 0
    %v406 = vsel %vm390, 1, 0
    %v407 = vsel %vm391, 1, 0
    %v408 = vsel %vm392, 1, 0
    %v409 = vcvt.s32.f32 %v393
    %v410 = vcvt.s32.f32 %v394
    %v411 = vcvt.s32.f32 %v395
    %v412 = vcvt.s32.f32 %v396
    %v413 = vcvt.s32.f32 %v397
    %v414 = vcvt.s32.f32 %v398
    %v415 = vcvt.s32.f32 %v399
    %v416 = vcvt.s32.f32 %v400
    %v417 = vcvt.s32.f32 %v401
    %v418 = vcvt.s32.f32 %v402
    %v419 = vcvt.s32.f32 %v403
    %v420 = vcvt.s32.f32 %v404
    %v421 = vcvt.s32.f32 %v405
    %v422 = vcvt.s32.f32 %v406
    %v423 = vcvt.s32.f32 %v407
    %v424 = vcvt.s32.f32 %v408
    %v425 = vadd.f32 %v295, %v409
    %v426 = vadd.f32 %v296, %v410
    %v427 = vadd.f32 %v297, %v411
    %v428 = vadd.f32 %v298, %v412
    %v429 = vadd.f32 %v299, %v413
    %v430 = vadd.f32 %v300, %v414
    %v431 = vadd.f32 %v301, %v415
    %v432 = vadd.f32 %v302, %v416
    %v433 = vadd.f32 %v303, %v417
    %v434 = vadd.f32 %v304, %v418
    %v435 = vadd.f32 %v305, %v419
    %v436 = vadd.f32 %v306, %v420
    %v437 = vadd.f32 %v307, %v421
    %v438 = vadd.f32 %v308, %v422
    %v439 = vadd.f32 %v309, %v423
    %v440 = vadd.f32 %v310, %v424
    %v442 = vlaneseq
    %v443 = vshrl.u32 %v442, 7
    %v444 = vsub.s32 0, %v443
    %v445 = vrot.slane %v48, %v444
    %v447 = vmul.f32 %v425, %v445
    %v448 = vmul.f32 %v426, %v445
    %v449 = vmul.f32 %v427, %v445
    %v450 = vmul.f32 %v428, %v445
    %v451 = vmul.f32 %v429, %v445
    %v452 = vmul.f32 %v430, %v445
    %v453 = vmul.f32 %v431, %v445
    %v454 = vmul.f32 %v432, %v445
    %v455 = vmul.f32 %v433, %v445
    %v456 = vmul.f32 %v434, %v445
    %v457 = vmul.f32 %v435, %v445
    %v458 = vmul.f32 %v436, %v445
    %v459 = vmul.f32 %v437, %v445
    %v460 = vmul.f32 %v438, %v445
    %v461 = vmul.f32 %v439, %v445
    %v462 = vmul.f32 %v440, %v445
    %463 = vadd.xlane.f32.xlu0 %v447
    %v464 = vpop.xlane.xlu0 %463
    %465 = vadd.xlane.f32.xlu0 %v448
    %v466 = vpop.xlane.xlu0 %465
    %467 = vadd.xlane.f32.xlu0 %v449
    %v468 = vpop.xlane.xlu0 %467
    %469 = vadd.xlane.f32.xlu0 %v450
    %v470 = vpop.xlane.xlu0 %469
    %471 = vadd.xlane.f32.xlu0 %v451
    %v472 = vpop.xlane.xlu0 %471
    %473 = vadd.xlane.f32.xlu0 %v452
    %v474 = vpop.xlane.xlu0 %473
    %475 = vadd.xlane.f32.xlu0 %v453
    %v476 = vpop.xlane.xlu0 %475
    %477 = vadd.xlane.f32.xlu0 %v454
    %v478 = vpop.xlane.xlu0 %477
    %479 = vadd.xlane.f32.xlu0 %v455
    %v480 = vpop.xlane.xlu0 %479
    %481 = vadd.xlane.f32.xlu0 %v456
    %v482 = vpop.xlane.xlu0 %481
    %483 = vadd.xlane.f32.xlu0 %v457
    %v484 = vpop.xlane.xlu0 %483
    %485 = vadd.xlane.f32.xlu0 %v458
    %v486 = vpop.xlane.xlu0 %485
    %487 = vadd.xlane.f32.xlu0 %v459
    %v488 = vpop.xlane.xlu0 %487
    %489 = vadd.xlane.f32.xlu0 %v460
    %v490 = vpop.xlane.xlu0 %489
    %491 = vadd.xlane.f32.xlu0 %v461
    %v492 = vpop.xlane.xlu0 %491
    %493 = vadd.xlane.f32.xlu0 %v462
    %v494 = vpop.xlane.xlu0 %493
    %s495 = sld [smem:[#allocation2]]
    %v496 = vstv %s495
    %v497 = vadd.f32 %v464, %v496
    %v498 = vadd.f32 %v466, %v496
    %v499 = vadd.f32 %v468, %v496
    %v500 = vadd.f32 %v470, %v496
    %v501 = vadd.f32 %v472, %v496
    %v502 = vadd.f32 %v474, %v496
    %v503 = vadd.f32 %v476, %v496
    %v504 = vadd.f32 %v478, %v496
    %v505 = vadd.f32 %v480, %v496
    %v506 = vadd.f32 %v482, %v496
    %v507 = vadd.f32 %v484, %v496
    %v508 = vadd.f32 %v486, %v496
    %v509 = vadd.f32 %v488, %v496
    %v510 = vadd.f32 %v490, %v496
    %v511 = vadd.f32 %v492, %v496
    %v512 = vadd.f32 %v494, %v496
    %v529 = vlaneseq
    %v530 = vshrl.u32 %v529, 7
    %v531 = vsub.s32 %v50, %v530
    %v532 = vrot.slane %v497, %v531
    %v533 = vadd.s32 %v50, 4294967288
    %v534 = vlaneseq
    %v535 = vshrl.u32 %v534, 7
    %v536 = vsub.s32 %v533, %v535
    %v537 = vrot.slane %v498, %v536
    %vm538 = vcmask 130112
    %v539 = vsel %vm538, %v537, %v532
    %v540 = vadd.s32 %v50, 4294967280
    %v541 = vlaneseq
    %v542 = vshrl.u32 %v541, 7
    %v543 = vsub.s32 %v540, %v542
    %v544 = vrot.slane %v499, %v543
    %vm545 = vcmask 195712
    %v546 = vsel %vm545, %v544, %v539
    %v547 = vadd.s32 %v50, 4294967272
    %v548 = vlaneseq
    %v549 = vshrl.u32 %v548, 7
    %v550 = vsub.s32 %v547, %v549
    %v551 = vrot.slane %v500, %v550
    %vm552 = vcmask 261312
    %v553 = vsel %vm552, %v551, %v546
    %v554 = vadd.s32 %v50, 4294967264
    %v555 = vlaneseq
    %v556 = vshrl.u32 %v555, 7
    %v557 = vsub.s32 %v554, %v556
    %v558 = vrot.slane %v501, %v557
    %vm559 = vcmask 326912
    %v560 = vsel %vm559, %v558, %v553
    %v561 = vadd.s32 %v50, 4294967256
    %v562 = vlaneseq
    %v563 = vshrl.u32 %v562, 7
    %v564 = vsub.s32 %v561, %v563
    %v565 = vrot.slane %v502, %v564
    %vm566 = vcmask 392512
    %v567 = vsel %vm566, %v565, %v560
    %v568 = vadd.s32 %v50, 4294967248
    %v569 = vlaneseq
    %v570 = vshrl.u32 %v569, 7
    %v571 = vsub.s32 %v568, %v570
    %v572 = vrot.slane %v503, %v571
    %vm573 = vcmask 458112
    %v574 = vsel %vm573, %v572, %v567
    %v575 = vadd.s32 %v50, 4294967240
    %v576 = vlaneseq
    %v577 = vshrl.u32 %v576, 7
    %v578 = vsub.s32 %v575, %v577
    %v579 = vrot.slane %v504, %v578
    %vm580 = vcmask 523712
    %v581 = vsel %vm580, %v579, %v574
    %v582 = vadd.s32 %v50, 4294967232
    %v583 = vlaneseq
    %v584 = vshrl.u32 %v583, 7
    %v585 = vsub.s32 %v582, %v584
    %v586 = vrot.slane %v505, %v585
    %vm587 = vcmask 589312
    %v588 = vsel %vm587, %v586, %v581
    %v589 = vadd.s32 %v50, 4294967224
    %v590 = vlaneseq
    %v591 = vshrl.u32 %v590, 7
    %v592 = vsub.s32 %v589, %v591
    %v593 = vrot.slane %v506, %v592
    %vm594 = vcmask 654912
    %v595 = vsel %vm594, %v593, %v588
    %v596 = vadd.s32 %v50, 4294967216
    %v597 = vlaneseq
    %v598 = vshrl.u32 %v597, 7
    %v599 = vsub.s32 %v596, %v598
    %v600 = vrot.slane %v507, %v599
    %vm601 = vcmask 720512
    %v602 = vsel %vm601, %v600, %v595
    %v603 = vadd.s32 %v50, 4294967208
    %v604 = vlaneseq
    %v605 = vshrl.u32 %v604, 7
    %v606 = vsub.s32 %v603, %v605
    %v607 = vrot.slane %v508, %v606
    %vm608 = vcmask 786112
    %v609 = vsel %vm608, %v607, %v602
    %v610 = vadd.s32 %v50, 4294967200
    %v611 = vlaneseq
    %v612 = vshrl.u32 %v611, 7
    %v613 = vsub.s32 %v610, %v612
    %v614 = vrot.slane %v509, %v613
    %vm615 = vcmask 851712
    %v616 = vsel %vm615, %v614, %v609
    %v617 = vadd.s32 %v50, 4294967192
    %v618 = vlaneseq
    %v619 = vshrl.u32 %v618, 7
    %v620 = vsub.s32 %v617, %v619
    %v621 = vrot.slane %v510, %v620
    %vm622 = vcmask 917312
    %v623 = vsel %vm622, %v621, %v616
    %v624 = vadd.s32 %v50, 4294967184
    %v625 = vlaneseq
    %v626 = vshrl.u32 %v625, 7
    %v627 = vsub.s32 %v624, %v626
    %v628 = vrot.slane %v511, %v627
    %vm629 = vcmask 982912
    %v630 = vsel %vm629, %v628, %v623
    %v631 = vadd.s32 %v50, 4294967176
    %v632 = vlaneseq
    %v633 = vshrl.u32 %v632, 7
    %v634 = vsub.s32 %v631, %v633
    %v635 = vrot.slane %v512, %v634
    %vm636 = vcmask 1048512
    %v637 = vsel %vm636, %v635, %v630
    %639 = vst [vmem:[#allocation6] sm:$0x1] %v637
    // Predicated region
    $region22: #{tpu_custom_call.1} parent=1 // pred_check
      _
    $region23: #{tpu_custom_call.1} parent=1 // pred_check_branch
      %641 = sbr.rel (0) target = $region25
    $region24: #{tpu_custom_call.1} parent=1 // pred_region
      %s643 = ssub.s32 16, 16
      %644 = vsyncadd [#allocation4], %s643
      %s646 = sshll.u32 [#allocation6], 4
      %s647 = int_to_ptr.vmem [resolvable:$true] %s646
      %649 = dma.vmem_to_hbm [thread:$0]  %s647, 16, %s4, [#allocation4]
    $region25: #{tpu_custom_call.1} parent=1 // pred_fallthru
      _
    // Predicated region
    $region26: #{tpu_custom_call.1} parent=1 // pred_check
      _
    $region27: #{tpu_custom_call.1} parent=1 // pred_check_branch
      %651 = sbr.rel (0) target = $region29
    $region28: #{tpu_custom_call.1} parent=1 // pred_region
      %652 = dma.done [#allocation4], 16
    $region29: #{tpu_custom_call.1} parent=1 // pred_fallthru
      _
    %653 = vsyncpa [#allocation4], 1
    %654 = vsyncpa [#allocation5], 1

</llo_original>
